<compile_context>
chip_gen: v7x
topology: tpu7x:2x2x1
jax: 0.10.0
libtpu: 0.0.40
codegen_flags: <defaults>
</compile_context>

<pallas_src>
import jax
import jax.numpy as jnp
from jax import lax
from jax.experimental import pallas as pl
from jax.experimental.pallas import tpu as pltpu


def _round_up(x, m):
    return (x + m - 1) // m * m


def _make_edge_mlp_kernel(sub_rows: int, n_sub: int):
    """Builds the kernel for one (bn, in_size) row block, sub-tiled by rows."""

    def kernel(hsrc_ref, hdst_ref, w1_ref, b1_ref, w2_ref, b2_ref, out_ref):
        # Resident weights / biases (constant index_map, tiny): load once.
        w1 = w1_ref[...]          # bf16 [in_size, hidden]
        b1 = b1_ref[...]          # f32  [1, hidden]
        w2 = w2_ref[...]          # bf16 [hidden, out_size]
        b2 = b2_ref[...]          # f32  [1, out_size]

        def compute(t):
            r = pl.multiple_of(t * sub_rows, sub_rows)
            hs = hsrc_ref[pl.ds(r, sub_rows), :].astype(jnp.float32)
            hd = hdst_ref[pl.ds(r, sub_rows), :].astype(jnp.float32)
            # Elementwise product in f32 (VPU), rounded to bf16 for the MXU.
            prod = (hs * hd).astype(jnp.bfloat16)
            # Linear 1: bf16 operands, f32 accumulation; bias + ReLU in f32.
            h1 = jnp.dot(prod, w1, preferred_element_type=jnp.float32) + b1
            h1 = jnp.maximum(h1, 0.0)
            # Linear 2: bf16 operands, f32 accumulation.
            h2 = jnp.dot(h1.astype(jnp.bfloat16), w2,
                         preferred_element_type=jnp.float32) + b2
            # Sigmoid in f32 (EUP), cast to the caller's output dtype.
            out_ref[pl.ds(r, sub_rows), :] = jax.nn.sigmoid(h2).astype(out_ref.dtype)

        if n_sub == 1:
            compute(0)
        else:
            # Not unrolled: bounds live ranges so per-sub-tile intermediates
            # stay vreg-sized instead of spilling full-block f32 scratch.
            def body(t, carry):
                compute(t)
                return carry
            lax.fori_loop(0, n_sub, body, 0)

    return kernel


def elementwise_product_predictor(h_src, h_dst, w1, b1, w2, b2, *,
                                  block_n=4096, sub_n=512):
    """h_src, h_dst: [N, in_size]; w1: [in_size, hidden]; b1: [hidden];
    w2: [hidden, out_size]; b2: [out_size]  (weights already transposed)."""
    N, in_size = h_src.shape
    hidden = w1.shape[1]
    out_size = w2.shape[1]
    out_dtype = h_src.dtype

    # Compute sub-tile (rows per in-kernel step) and DMA block (rows per grid
    # step).  bn is a multiple of 16 and of `sub`; grid handles the ragged tail.
    sub = _round_up(min(sub_n, _round_up(N, 16)), 16)
    bn = _round_up(min(block_n, _round_up(N, sub)), sub)
    n_sub = bn // sub
    grid = (pl.cdiv(N, bn),)   # last block: padded reads, masked output writes

    # Weights are O(1)-sized (~10 KiB): one-time cast/reshape is negligible.
    w1b = w1.astype(jnp.bfloat16)
    w2b = w2.astype(jnp.bfloat16)
    b1_2d = b1.reshape(1, hidden).astype(jnp.float32)
    b2_2d = b2.reshape(1, out_size).astype(jnp.float32)

    # VMEM accounting (lane-padded to 128): 2 f32 input tiles + 1 f32 output
    # tile, each double-buffered -> 6 * bn * 128 * 4 bytes (~12 MiB @ bn=4096),
    # plus headroom for weights / internal scratch.  Explicit limit so bn=4096
    # also fits v5e's 16 MiB default scoped VMEM; stays well under physical
    # VMEM on every generation (v7x: 64 MiB/TC).
    vmem_need = 6 * bn * 128 * 4
    vmem_limit = int(min(vmem_need + (8 << 20), 48 << 20))

    out = pl.pallas_call(
        _make_edge_mlp_kernel(sub, n_sub),
        out_shape=jax.ShapeDtypeStruct((N, out_size), out_dtype),
        grid_spec=pltpu.PrefetchScalarGridSpec(
            num_scalar_prefetch=0,
            grid=grid,
            in_specs=[
                pl.BlockSpec((bn, in_size), lambda i: (i, 0)),       # h_src tile
                pl.BlockSpec((bn, in_size), lambda i: (i, 0)),       # h_dst tile
                pl.BlockSpec((in_size, hidden), lambda i: (0, 0)),   # W1 (resident, bf16)
                pl.BlockSpec((1, hidden), lambda i: (0, 0)),         # b1 (f32)
                pl.BlockSpec((hidden, out_size), lambda i: (0, 0)),  # W2 (resident, bf16)
                pl.BlockSpec((1, out_size), lambda i: (0, 0)),       # b2 (f32)
            ],
            out_specs=pl.BlockSpec((bn, out_size), lambda i: (i, 0)),
        ),
        compiler_params=pltpu.CompilerParams(
            # "parallel" lets the 1-D grid shard across v7x's two TensorCores.
            dimension_semantics=("parallel",),
            vmem_limit_bytes=vmem_limit,
        ),
    )(h_src, h_dst, w1b, b1_2d, w2b, b2_2d)

    return out


def _init_linear(key, in_features, out_features, dtype=jnp.float32):
    """Deterministic PyTorch-style init: U(-1/sqrt(in), 1/sqrt(in)).
    Returns weight already transposed to [in, out] plus bias [out]."""
    kw, kb = jax.random.split(key)
    bound = 1.0 / (in_features ** 0.5)
    w = jax.random.uniform(kw, (in_features, out_features), dtype, -bound, bound)
    b = jax.random.uniform(kb, (out_features,), dtype, -bound, bound)
    return w, b


def _reference_f32(h_src, h_dst, w1, b1, w2, b2):
    h = h_src * h_dst
    h = jnp.maximum(
        jnp.dot(h, w1, precision=lax.Precision.HIGHEST) + b1, 0.0)
    h = jnp.dot(h, w2, precision=lax.Precision.HIGHEST) + b2
    return jax.nn.sigmoid(h)


def _reference_bf16_path(h_src, h_dst, w1, b1, w2, b2):
    """Pure-JAX reference mimicking the kernel's bf16 operand rounding."""
    f32, bf16 = jnp.float32, jnp.bfloat16
    h = (h_src.astype(f32) * h_dst.astype(f32)).astype(bf16).astype(f32)
    h1 = jnp.dot(h, w1.astype(bf16).astype(f32),
                 precision=lax.Precision.HIGHEST) + b1
    h1 = jnp.maximum(h1, 0.0)
    h2 = jnp.dot(h1.astype(bf16).astype(f32), w2.astype(bf16).astype(f32),
                 precision=lax.Precision.HIGHEST) + b2
    return jax.nn.sigmoid(h2)


if __name__ == "__main__":
    # Small shapes consistent with the module: N edges, in_size node-feat dim,
    # hidden_size=64 (default), out_size=8, num_layers=2.  N=200 is not a
    # multiple of the tile -> exercises the ragged last block.
    N, in_size, hidden_size, out_size = 200, 32, 64, 8

    key = jax.random.PRNGKey(0)
    k_src, k_dst, k_l1, k_l2 = jax.random.split(key, 4)

    h_src = jax.random.normal(k_src, (N, in_size), jnp.float32)
    h_dst = jax.random.normal(k_dst, (N, in_size), jnp.float32)

    w1, b1 = _init_linear(k_l1, in_size, hidden_size)
    w2, b2 = _init_linear(k_l2, hidden_size, out_size)

    ref_bf16 = _reference_bf16_path(h_src, h_dst, w1, b1, w2, b2)
    ref_f32 = _reference_f32(h_src, h_dst, w1, b1, w2, b2)

    # Default path: single grid step, single sub-tile.
    out = elementwise_product_predictor(h_src, h_dst, w1, b1, w2, b2)
    out = jax.block_until_ready(out)
    assert out.shape == (N, out_size)
    assert bool(jnp.all(jnp.isfinite(out)))
    assert jnp.allclose(out, ref_bf16, atol=1e-4, rtol=1e-4), "mismatch vs bf16-path reference"
    assert jnp.allclose(out, ref_f32, atol=3e-2, rtol=3e-2), "mismatch vs f32 reference"

    # Small-tile path: multi-step grid + in-kernel sub-tiling + ragged tail.
    out2 = elementwise_product_predictor(h_src, h_dst, w1, b1, w2, b2,
                                         block_n=64, sub_n=32)
    out2 = jax.block_until_ready(out2)
    assert out2.shape == (N, out_size)
    assert jnp.allclose(out2, ref_bf16, atol=1e-4, rtol=1e-4), "mismatch (tiled) vs bf16-path reference"

    print("KERNEL_OK")
</pallas_src>

<mosaic_0001>
module attributes {stable_mosaic.version = 11 : i64} {
  func.func @kernel(%arg0: i32, %arg1: memref<208x32xf32, #tpu.memory_space<vmem>>, %arg2: memref<208x32xf32, #tpu.memory_space<vmem>>, %arg3: memref<32x64xbf16, #tpu.memory_space<vmem>>, %arg4: memref<1x64xf32, #tpu.memory_space<vmem>>, %arg5: memref<64x8xbf16, #tpu.memory_space<vmem>>, %arg6: memref<1x8xf32, #tpu.memory_space<vmem>>, %arg7: memref<208x8xf32, #tpu.memory_space<vmem>>) attributes {dimension_semantics = [#tpu.dimension_semantics<parallel>], iteration_bounds = array<i64: 1>, scalar_prefetch = 0 : i64, scratch_operands = 0 : i64, tpu.core_type = #tpu.core_type<tc>, window_params = [{transform_indices = @transform_0, window_bounds = array<i64: 208, 32>}, {transform_indices = @transform_1, window_bounds = array<i64: 208, 32>}, {pipeline_mode = #tpu.pipeline_mode<synchronous>, transform_indices = @transform_2, window_bounds = array<i64: 32, 64>}, {pipeline_mode = #tpu.pipeline_mode<synchronous>, transform_indices = @transform_3, window_bounds = array<i64: 1, 64>}, {pipeline_mode = #tpu.pipeline_mode<synchronous>, transform_indices = @transform_4, window_bounds = array<i64: 64, 8>}, {pipeline_mode = #tpu.pipeline_mode<synchronous>, transform_indices = @transform_5, window_bounds = array<i64: 1, 8>}, {transform_indices = @transform_6, window_bounds = array<i64: 208, 8>}]} {
    %c0 = arith.constant 0 : index
    %c0_0 = arith.constant 0 : index
    %0 = vector.load %arg3[%c0, %c0_0] : memref<32x64xbf16, #tpu.memory_space<vmem>>, vector<32x64xbf16>
    %c0_1 = arith.constant 0 : index
    %c0_2 = arith.constant 0 : index
    %1 = vector.load %arg4[%c0_1, %c0_2] : memref<1x64xf32, #tpu.memory_space<vmem>>, vector<1x64xf32>
    %c0_3 = arith.constant 0 : index
    %c0_4 = arith.constant 0 : index
    %2 = vector.load %arg5[%c0_3, %c0_4] : memref<64x8xbf16, #tpu.memory_space<vmem>>, vector<64x8xbf16>
    %c0_5 = arith.constant 0 : index
    %c0_6 = arith.constant 0 : index
    %3 = vector.load %arg6[%c0_5, %c0_6] : memref<1x8xf32, #tpu.memory_space<vmem>>, vector<1x8xf32>
    %c0_i32 = arith.constant 0 : i32
    %4 = tpu.assume_multiple %c0_i32, 208 : i32
    %5 = arith.index_cast %4 : i32 to index
    %c0_7 = arith.constant 0 : index
    %6 = vector.load %arg1[%5, %c0_7] : memref<208x32xf32, #tpu.memory_space<vmem>>, vector<208x32xf32>
    %7 = arith.index_cast %4 : i32 to index
    %c0_8 = arith.constant 0 : index
    %8 = vector.load %arg2[%7, %c0_8] : memref<208x32xf32, #tpu.memory_space<vmem>>, vector<208x32xf32>
    %9 = arith.mulf %6, %8 : vector<208x32xf32>
    %10 = arith.truncf %9 : vector<208x32xf32> to vector<208x32xbf16>
    %cst = arith.constant dense<0.000000e+00> : vector<208x64xf32>
    %11 = tpu.matmul %10, %0, %cst {dimension_numbers = #tpu.dot_dimension_numbers<[1], [0], [0], [1], [0, 0, 1, 1], [], []>} : vector<208x32xbf16>, vector<32x64xbf16>, vector<208x64xf32> -> vector<208x64xf32>
    %12 = vector.broadcast %1 : vector<1x64xf32> to vector<208x64xf32>
    %13 = arith.addf %11, %12 : vector<208x64xf32>
    %cst_9 = arith.constant 0.000000e+00 : f32
    %14 = vector.broadcast %cst_9 : f32 to vector<208x64xf32>
    %15 = arith.maximumf %13, %14 : vector<208x64xf32>
    %16 = arith.truncf %15 : vector<208x64xf32> to vector<208x64xbf16>
    %cst_10 = arith.constant dense<0.000000e+00> : vector<208x8xf32>
    %17 = tpu.matmul %16, %2, %cst_10 {dimension_numbers = #tpu.dot_dimension_numbers<[1], [0], [0], [1], [0, 0, 1, 1], [], []>} : vector<208x64xbf16>, vector<64x8xbf16>, vector<208x8xf32> -> vector<208x8xf32>
    %18 = vector.broadcast %3 : vector<1x8xf32> to vector<208x8xf32>
    %19 = arith.addf %17, %18 : vector<208x8xf32>
    %20 = arith.negf %19 : vector<208x8xf32>
    %21 = math.exp %20 : vector<208x8xf32>
    %cst_11 = arith.constant 1.000000e+00 : f32
    %22 = vector.broadcast %cst_11 : f32 to vector<208x8xf32>
    %23 = arith.addf %22, %21 : vector<208x8xf32>
    %24 = arith.divf %22, %23 : vector<208x8xf32>
    %25 = arith.index_cast %4 : i32 to index
    %c0_12 = arith.constant 0 : index
    %26 = vector.load %arg7[%25, %c0_12] : memref<208x8xf32, #tpu.memory_space<vmem>>, vector<208x8xf32>
    tpu.vector_store %arg7[%25, %c0_12], %24 {strides = array<i32>} : memref<208x8xf32, #tpu.memory_space<vmem>>, vector<208x8xf32>,
    return
  }
  func.func @transform_0(%arg0: i32) -> (i32, i32) {
    %c0_i32 = arith.constant 0 : i32
    %c0_i32_0 = arith.constant 0 : i32
    return %arg0, %c0_i32 : i32, i32
  }
  func.func @transform_1(%arg0: i32) -> (i32, i32) {
    %c0_i32 = arith.constant 0 : i32
    %c0_i32_0 = arith.constant 0 : i32
    return %arg0, %c0_i32 : i32, i32
  }
  func.func @transform_2(%arg0: i32) -> (i32, i32) {
    %c0_i32 = arith.constant 0 : i32
    %c0_i32_0 = arith.constant 0 : i32
    %c0_i32_1 = arith.constant 0 : i32
    return %c0_i32, %c0_i32_0 : i32, i32
  }
  func.func @transform_3(%arg0: i32) -> (i32, i32) {
    %c0_i32 = arith.constant 0 : i32
    %c0_i32_0 = arith.constant 0 : i32
    %c0_i32_1 = arith.constant 0 : i32
    return %c0_i32, %c0_i32_0 : i32, i32
  }
  func.func @transform_4(%arg0: i32) -> (i32, i32) {
    %c0_i32 = arith.constant 0 : i32
    %c0_i32_0 = arith.constant 0 : i32
    %c0_i32_1 = arith.constant 0 : i32
    return %c0_i32, %c0_i32_0 : i32, i32
  }
  func.func @transform_5(%arg0: i32) -> (i32, i32) {
    %c0_i32 = arith.constant 0 : i32
    %c0_i32_0 = arith.constant 0 : i32
    %c0_i32_1 = arith.constant 0 : i32
    return %c0_i32, %c0_i32_0 : i32, i32
  }
  func.func @transform_6(%arg0: i32) -> (i32, i32) {
    %c0_i32 = arith.constant 0 : i32
    %c0_i32_0 = arith.constant 0 : i32
    return %arg0, %c0_i32 : i32, i32
  }
}

</mosaic_0001>

<llo_original>
// kernel: tpu_custom_call.1
$region0: #{tpu_custom_call.1}
  #allocation0 [shape = 'u32[]', space=smem, size = 0x4, offset = 0x4, fixed_abs, tag = 'smem constant byte address 0x4 - core index']
  #allocation1 [shape = 'u32[144,128]{1,0:T(1,128)}', space=vmem, size = 0x12000, scoped, tag = 'internal scratch']
  %s0 = inlined_call_operand.vmem [shape: f32[200,32], index: 0, kind: input, shape index: {}]
  %s1 = inlined_call_operand.vmem [shape: f32[200,32], index: 1, kind: input, shape index: {}]
  %s2 = inlined_call_operand.vmem [shape: bf16[32,64], index: 2, kind: input, shape index: {}]
  %s3 = inlined_call_operand.vmem [shape: f32[1,64], index: 3, kind: input, shape index: {}]
  %s4 = inlined_call_operand.vmem [shape: bf16[64,8], index: 4, kind: input, shape index: {}]
  %s5 = inlined_call_operand.vmem [shape: f32[1,8], index: 5, kind: input, shape index: {}]
  %s6 = inlined_call_operand.vmem [shape: f32[200,8], index: 6, kind: output, shape index: {}]
  %s7 = sld [smem:[#allocation0]]
  $region68: #{tpu_custom_call.1} parent=0
    _
  %s9 = ssub.s32 1, %s7
  %s10 = scalar_select 0, %s9, %s7
  $region1: #{tpu_custom_call.1} parent=0
    #allocation2 [shape = 'u8[106496]{0}', space=vmem, size = 0x1a000, scoped, tag = 'output window, operand 0, single buffered']
    // Predicated region
    $region2: #{tpu_custom_call.1} parent=1 // pred_check
      _
    $region3: #{tpu_custom_call.1} parent=1 // pred_check_branch
      %12 = sbr.rel (0) target = $region5
    $region4: #{tpu_custom_call.1} parent=1 // pred_region
      _
    $region5: #{tpu_custom_call.1} parent=1 // pred_fallthru
      _
    // Predicated region
    $region6: #{tpu_custom_call.1} parent=1 // pred_check
      _
    $region7: #{tpu_custom_call.1} parent=1 // pred_check_branch
      %14 = sbr.rel (0) target = $region9
    $region8: #{tpu_custom_call.1} parent=1 // pred_region
      _
    $region9: #{tpu_custom_call.1} parent=1 // pred_fallthru
      _
    // Predicated region
    $region10: #{tpu_custom_call.1} parent=1 // pred_check
      _
    $region11: #{tpu_custom_call.1} parent=1 // pred_check_branch
      %16 = sbr.rel (0) target = $region13
    $region12: #{tpu_custom_call.1} parent=1 // pred_region
      _
    $region13: #{tpu_custom_call.1} parent=1 // pred_fallthru
      _
    // Predicated region
    $region14: #{tpu_custom_call.1} parent=1 // pred_check
      _
    $region15: #{tpu_custom_call.1} parent=1 // pred_check_branch
      %18 = sbr.rel (0) target = $region17
    $region16: #{tpu_custom_call.1} parent=1 // pred_region
      _
    $region17: #{tpu_custom_call.1} parent=1 // pred_fallthru
      _
    // Predicated region
    $region18: #{tpu_custom_call.1} parent=1 // pred_check
      _
    $region19: #{tpu_custom_call.1} parent=1 // pred_check_branch
      %20 = sbr.rel (0) target = $region21
    $region20: #{tpu_custom_call.1} parent=1 // pred_region
      _
    $region21: #{tpu_custom_call.1} parent=1 // pred_fallthru
      _
    // Predicated region
    $region22: #{tpu_custom_call.1} parent=1 // pred_check
      _
    $region23: #{tpu_custom_call.1} parent=1 // pred_check_branch
      %22 = sbr.rel (0) target = $region25
    $region24: #{tpu_custom_call.1} parent=1 // pred_region
      _
    $region25: #{tpu_custom_call.1} parent=1 // pred_fallthru
      _
    %v24 = vld [vmem:[%s2] sm:$0xf]
    %v25 = vld [vmem:[%s2 + $0x4] sm:$0xf]
    %v26 = vld [vmem:[%s2 + $0x8] sm:$0xf]
    %v27 = vld [vmem:[%s2 + $0xc] sm:$0xf]
    %v28 = vld [vmem:[%s3] sm:$0x1]
    %v29 = vld [vmem:[%s4] sm:$0xf]
    %v30 = vld [vmem:[%s4 + $0x4] sm:$0xf]
    %v31 = vld [vmem:[%s4 + $0x8] sm:$0xf]
    %v32 = vld [vmem:[%s4 + $0xc] sm:$0xf]
    %v33 = vld [vmem:[%s4 + $0x10] sm:$0xf]
    %v34 = vld [vmem:[%s4 + $0x14] sm:$0xf]
    %v35 = vld [vmem:[%s4 + $0x18] sm:$0xf]
    %v36 = vld [vmem:[%s4 + $0x1c] sm:$0xf]
    %v37 = vld [vmem:[%s5] sm:$0x1]
    %v38 = vld [vmem:[%s0] sm:$0xff]
    %v39 = vld [vmem:[%s0 + $0x8] sm:$0xff]
    %v40 = vld [vmem:[%s0 + $0x10] sm:$0xff]
    %v41 = vld [vmem:[%s0 + $0x18] sm:$0xff]
    %v42 = vld [vmem:[%s0 + $0x20] sm:$0xff]
    %v43 = vld [vmem:[%s0 + $0x28] sm:$0xff]
    %v44 = vld [vmem:[%s0 + $0x30] sm:$0xff]
    %v45 = vld [vmem:[%s0 + $0x38] sm:$0xff]
    %v46 = vld [vmem:[%s0 + $0x40] sm:$0xff]
    %v47 = vld [vmem:[%s0 + $0x48] sm:$0xff]
    %v48 = vld [vmem:[%s0 + $0x50] sm:$0xff]
    %v49 = vld [vmem:[%s0 + $0x58] sm:$0xff]
    %v50 = vld [vmem:[%s0 + $0x60] sm:$0xff]
    %v51 = vld [vmem:[%s0 + $0x68] sm:$0xff]
    %v52 = vld [vmem:[%s0 + $0x70] sm:$0xff]
    %v53 = vld [vmem:[%s0 + $0x78] sm:$0xff]
    %v54 = vld [vmem:[%s0 + $0x80] sm:$0xff]
    %v55 = vld [vmem:[%s0 + $0x88] sm:$0xff]
    %v56 = vld [vmem:[%s0 + $0x90] sm:$0xff]
    %v57 = vld [vmem:[%s0 + $0x98] sm:$0xff]
    %v58 = vld [vmem:[%s0 + $0xa0] sm:$0xff]
    %v59 = vld [vmem:[%s0 + $0xa8] sm:$0xff]
    %v60 = vld [vmem:[%s0 + $0xb0] sm:$0xff]
    %v61 = vld [vmem:[%s0 + $0xb8] sm:$0xff]
    %v62 = vld [vmem:[%s0 + $0xc0] sm:$0xff]
    %v63 = vld [vmem:[%s0 + $0xc8] sm:$0xff]
    %v64 = vld [vmem:[%s1] sm:$0xff]
    %v65 = vld [vmem:[%s1 + $0x8] sm:$0xff]
    %v66 = vld [vmem:[%s1 + $0x10] sm:$0xff]
    %v67 = vld [vmem:[%s1 + $0x18] sm:$0xff]
    %v68 = vld [vmem:[%s1 + $0x20] sm:$0xff]
    %v69 = vld [vmem:[%s1 + $0x28] sm:$0xff]
    %v70 = vld [vmem:[%s1 + $0x30] sm:$0xff]
    %v71 = vld [vmem:[%s1 + $0x38] sm:$0xff]
    %v72 = vld [vmem:[%s1 + $0x40] sm:$0xff]
    %v73 = vld [vmem:[%s1 + $0x48] sm:$0xff]
    %v74 = vld [vmem:[%s1 + $0x50] sm:$0xff]
    %v75 = vld [vmem:[%s1 + $0x58] sm:$0xff]
    %v76 = vld [vmem:[%s1 + $0x60] sm:$0xff]
    %v77 = vld [vmem:[%s1 + $0x68] sm:$0xff]
    %v78 = vld [vmem:[%s1 + $0x70] sm:$0xff]
    %v79 = vld [vmem:[%s1 + $0x78] sm:$0xff]
    %v80 = vld [vmem:[%s1 + $0x80] sm:$0xff]
    %v81 = vld [vmem:[%s1 + $0x88] sm:$0xff]
    %v82 = vld [vmem:[%s1 + $0x90] sm:$0xff]
    %v83 = vld [vmem:[%s1 + $0x98] sm:$0xff]
    %v84 = vld [vmem:[%s1 + $0xa0] sm:$0xff]
    %v85 = vld [vmem:[%s1 + $0xa8] sm:$0xff]
    %v86 = vld [vmem:[%s1 + $0xb0] sm:$0xff]
    %v87 = vld [vmem:[%s1 + $0xb8] sm:$0xff]
    %v88 = vld [vmem:[%s1 + $0xc0] sm:$0xff]
    %v89 = vld [vmem:[%s1 + $0xc8] sm:$0xff]
    %v90 = vmul.f32 %v38, %v64
    %v91 = vmul.f32 %v39, %v65
    %v92 = vmul.f32 %v40, %v66
    %v93 = vmul.f32 %v41, %v67
    %v94 = vmul.f32 %v42, %v68
    %v95 = vmul.f32 %v43, %v69
    %v96 = vmul.f32 %v44, %v70
    %v97 = vmul.f32 %v45, %v71
    %v98 = vmul.f32 %v46, %v72
    %v99 = vmul.f32 %v47, %v73
    %v100 = vmul.f32 %v48, %v74
    %v101 = vmul.f32 %v49, %v75
    %v102 = vmul.f32 %v50, %v76
    %v103 = vmul.f32 %v51, %v77
    %v104 = vmul.f32 %v52, %v78
    %v105 = vmul.f32 %v53, %v79
    %v106 = vmul.f32 %v54, %v80
    %v107 = vmul.f32 %v55, %v81
    %v108 = vmul.f32 %v56, %v82
    %v109 = vmul.f32 %v57, %v83
    %v110 = vmul.f32 %v58, %v84
    %v111 = vmul.f32 %v59, %v85
    %v112 = vmul.f32 %v60, %v86
    %v113 = vmul.f32 %v61, %v87
    %v114 = vmul.f32 %v62, %v88
    %v115 = vmul.f32 %v63, %v89
    %v116 = vpack.c.bf16 %v91, %v90
    %v117 = vpack.c.bf16 %v93, %v92
    %v118 = vpack.c.bf16 %v95, %v94
    %v119 = vpack.c.bf16 %v97, %v96
    %v120 = vpack.c.bf16 %v99, %v98
    %v121 = vpack.c.bf16 %v101, %v100
    %v122 = vpack.c.bf16 %v103, %v102
    %v123 = vpack.c.bf16 %v105, %v104
    %v124 = vpack.c.bf16 %v107, %v106
    %v125 = vpack.c.bf16 %v109, %v108
    %v126 = vpack.c.bf16 %v111, %v110
    %v127 = vpack.c.bf16 %v113, %v112
    %v128 = vpack.c.bf16 %v115, %v114
    %v130 = vlaneseq
    %v131 = vshrl.u32 %v130, 7
    %v132 = vsub.s32 0, %v131
    %v133 = vrot.slane %v28, %v132
    %v139 = vunpack.c.l.b16 %v24
    %v140 = vunpack.c.l.b16 %v25
    %v141 = vunpack.c.l.b16 %v26
    %v142 = vunpack.c.l.b16 %v27
    %v143 = vpack.c.b16 %v140, %v139
    %v144 = vpack.c.b16 %v142, %v141
    %vm147 = vcmask 261120
    %v149 = vsel %vm147, %v116, 0
    %v152 = vsel %vm147, %v117, 0
    %v155 = vsel %vm147, %v118, 0
    %v158 = vsel %vm147, %v119, 0
    %v161 = vsel %vm147, %v120, 0
    %v164 = vsel %vm147, %v121, 0
    %v167 = vsel %vm147, %v122, 0
    %v170 = vsel %vm147, %v123, 0
    %v173 = vsel %vm147, %v124, 0
    %v176 = vsel %vm147, %v125, 0
    %v179 = vsel %vm147, %v126, 0
    %v182 = vsel %vm147, %v127, 0
    %v185 = vsel %vm147, %v128, 0
    %187 = vmatprep.subr.bf16.mxu0 0
    %188 = vmatpush1.bf16.msra.mxu0 %v143
    %189 = vmatprep.subr.bf16.mxu0 0
    %190 = vmatpush1.bf16.msra.mxu0 %v144
    %191 = vmatprep.subr.bf16.mxu0 0
    %192 = vmatpush1.bf16.msra.mxu0 0
    %193 = vmatprep.subr.bf16.mxu0 0
    %194 = vmatpush1.bf16.msra.mxu0 0
    %195 = vmatprep.subr.bf16.mxu0 0
    %196 = vmatpush1.bf16.msra.mxu0 0
    %197 = vmatprep.subr.bf16.mxu0 0
    %198 = vmatpush1.bf16.msra.mxu0 0
    %199 = vmatprep.subr.bf16.mxu0 0
    %200 = vmatpush1.bf16.msra.mxu0 0
    %201 = vmatprep.subr.bf16.mxu0 0
    %202 = vmatpush1.bf16.msra.mxu0 0
    %203 = vmatprep.subr.bf16.mxu0 0
    %204 = vmatpush1.bf16.msra.mxu0 0
    %205 = vmatprep.subr.bf16.mxu0 0
    %206 = vmatpush1.bf16.msra.mxu0 0
    %207 = vmatprep.subr.bf16.mxu0 0
    %208 = vmatpush1.bf16.msra.mxu0 0
    %209 = vmatprep.subr.bf16.mxu0 0
    %210 = vmatpush1.bf16.msra.mxu0 0
    %211 = vmatprep.subr.bf16.mxu0 0
    %212 = vmatpush1.bf16.msra.mxu0 0
    %213 = vmatprep.subr.bf16.mxu0 0
    %214 = vmatpush1.bf16.msra.mxu0 0
    %215 = vmatprep.subr.bf16.mxu0 0
    %216 = vmatpush1.bf16.msra.mxu0 0
    %217 = vmatprep.subr.bf16.mxu0 0
    %218 = vmatpush1.bf16.msra.mxu0 0
    %219 = vmatprep.mubr.bf16.mxu0 0
    %220 = vmatmul.mubr.bf16.gmra.mrb[0].mxu0 %v149
    %v221 = vpop.f32.mrb[0].mxu0
    %v222 = vadd.f32 %v133, %v221
    %v223 = vpop.f32.mrb[0].mxu0
    %v224 = vpop.f32.mrb[0].mxu0
    %v225 = vadd.f32 %v133, %v224
    %v226 = vpop.f32.mrb[0].mxu0
    %227 = vmatprep.mubr.bf16.mxu0 0
    %228 = vmatmul.mubr.bf16.gmra.mrb[0].mxu0 %v152
    %v229 = vpop.f32.mrb[0].mxu0
    %v230 = vadd.f32 %v133, %v229
    %v231 = vpop.f32.mrb[0].mxu0
    %v232 = vpop.f32.mrb[0].mxu0
    %v233 = vadd.f32 %v133, %v232
    %v234 = vpop.f32.mrb[0].mxu0
    %235 = vmatprep.mubr.bf16.mxu0 0
    %236 = vmatmul.mubr.bf16.gmra.mrb[0].mxu0 %v155
    %v237 = vpop.f32.mrb[0].mxu0
    %v238 = vadd.f32 %v133, %v237
    %v239 = vpop.f32.mrb[0].mxu0
    %v240 = vpop.f32.mrb[0].mxu0
    %v241 = vadd.f32 %v133, %v240
    %v242 = vpop.f32.mrb[0].mxu0
    %243 = vmatprep.mubr.bf16.mxu0 0
    %244 = vmatmul.mubr.bf16.gmra.mrb[0].mxu0 %v158
    %v245 = vpop.f32.mrb[0].mxu0
    %v246 = vadd.f32 %v133, %v245
    %v247 = vpop.f32.mrb[0].mxu0
    %v248 = vpop.f32.mrb[0].mxu0
    %v249 = vadd.f32 %v133, %v248
    %v250 = vpop.f32.mrb[0].mxu0
    %251 = vmatprep.mubr.bf16.mxu0 0
    %252 = vmatmul.mubr.bf16.gmra.mrb[0].mxu0 %v161
    %v253 = vpop.f32.mrb[0].mxu0
    %v254 = vadd.f32 %v133, %v253
    %v255 = vpop.f32.mrb[0].mxu0
    %v256 = vpop.f32.mrb[0].mxu0
    %v257 = vadd.f32 %v133, %v256
    %v258 = vpop.f32.mrb[0].mxu0
    %259 = vmatprep.mubr.bf16.mxu0 0
    %260 = vmatmul.mubr.bf16.gmra.mrb[0].mxu0 %v164
    %v261 = vpop.f32.mrb[0].mxu0
    %v262 = vadd.f32 %v133, %v261
    %v263 = vpop.f32.mrb[0].mxu0
    %v264 = vpop.f32.mrb[0].mxu0
    %v265 = vadd.f32 %v133, %v264
    %v266 = vpop.f32.mrb[0].mxu0
    %267 = vmatprep.mubr.bf16.mxu0 0
    %268 = vmatmul.mubr.bf16.gmra.mrb[0].mxu0 %v167
    %v269 = vpop.f32.mrb[0].mxu0
    %v270 = vadd.f32 %v133, %v269
    %v271 = vpop.f32.mrb[0].mxu0
    %v272 = vpop.f32.mrb[0].mxu0
    %v273 = vadd.f32 %v133, %v272
    %v274 = vpop.f32.mrb[0].mxu0
    %275 = vmatprep.mubr.bf16.mxu0 0
    %276 = vmatmul.mubr.bf16.gmra.mrb[0].mxu0 %v170
    %v277 = vpop.f32.mrb[0].mxu0
    %v278 = vadd.f32 %v133, %v277
    %v279 = vpop.f32.mrb[0].mxu0
    %v280 = vpop.f32.mrb[0].mxu0
    %v281 = vadd.f32 %v133, %v280
    %v282 = vpop.f32.mrb[0].mxu0
    %283 = vmatprep.mubr.bf16.mxu0 0
    %284 = vmatmul.mubr.bf16.gmra.mrb[0].mxu0 %v173
    %v285 = vpop.f32.mrb[0].mxu0
    %v286 = vadd.f32 %v133, %v285
    %v287 = vpop.f32.mrb[0].mxu0
    %v288 = vpop.f32.mrb[0].mxu0
    %v289 = vadd.f32 %v133, %v288
    %v290 = vpop.f32.mrb[0].mxu0
    %291 = vmatprep.mubr.bf16.mxu0 0
    %292 = vmatmul.mubr.bf16.gmra.mrb[0].mxu0 %v176
    %v293 = vpop.f32.mrb[0].mxu0
    %v294 = vadd.f32 %v133, %v293
    %v295 = vpop.f32.mrb[0].mxu0
    %v296 = vpop.f32.mrb[0].mxu0
    %v297 = vadd.f32 %v133, %v296
    %v298 = vpop.f32.mrb[0].mxu0
    %299 = vmatprep.mubr.bf16.mxu0 0
    %300 = vmatmul.mubr.bf16.gmra.mrb[0].mxu0 %v179
    %v301 = vpop.f32.mrb[0].mxu0
    %v302 = vadd.f32 %v133, %v301
    %v303 = vpop.f32.mrb[0].mxu0
    %v304 = vpop.f32.mrb[0].mxu0
    %v305 = vadd.f32 %v133, %v304
    %v306 = vpop.f32.mrb[0].mxu0
    %307 = vmatprep.mubr.bf16.mxu0 0
    %308 = vmatmul.mubr.bf16.gmra.mrb[0].mxu0 %v182
    %v309 = vpop.f32.mrb[0].mxu0
    %v310 = vadd.f32 %v133, %v309
    %v311 = vpop.f32.mrb[0].mxu0
    %v312 = vpop.f32.mrb[0].mxu0
    %v313 = vadd.f32 %v133, %v312
    %v314 = vpop.f32.mrb[0].mxu0
    %315 = vmatprep.mubr.bf16.mxu0 0
    %316 = vmatmul.mubr.bf16.gmra.mrb[0].mxu0 %v185
    %v317 = vpop.f32.mrb[0].mxu0
    %v318 = vadd.f32 %v133, %v317
    %v319 = vpop.f32.mrb[0].mxu0
    %v320 = vpop.f32.mrb[0].mxu0
    %v321 = vadd.f32 %v133, %v320
    %v322 = vpop.f32.mrb[0].mxu0
    %323 = vdwg.mxu0
    %v324 = vmax.f32 %v222, 0.0
    %v325 = vmax.f32 %v225, 0.0
    %v326 = vmax.f32 %v230, 0.0
    %v327 = vmax.f32 %v233, 0.0
    %v328 = vmax.f32 %v238, 0.0
    %v329 = vmax.f32 %v241, 0.0
    %v330 = vmax.f32 %v246, 0.0
    %v331 = vmax.f32 %v249, 0.0
    %v332 = vmax.f32 %v254, 0.0
    %v333 = vmax.f32 %v257, 0.0
    %v334 = vmax.f32 %v262, 0.0
    %v335 = vmax.f32 %v265, 0.0
    %v336 = vmax.f32 %v270, 0.0
    %v337 = vmax.f32 %v273, 0.0
    %v338 = vmax.f32 %v278, 0.0
    %v339 = vmax.f32 %v281, 0.0
    %v340 = vmax.f32 %v286, 0.0
    %v341 = vmax.f32 %v289, 0.0
    %v342 = vmax.f32 %v294, 0.0
    %v343 = vmax.f32 %v297, 0.0
    %v344 = vmax.f32 %v302, 0.0
    %v345 = vmax.f32 %v305, 0.0
    %v346 = vmax.f32 %v310, 0.0
    %v347 = vmax.f32 %v313, 0.0
    %v348 = vmax.f32 %v318, 0.0
    %v349 = vmax.f32 %v321, 0.0
    %v350 = vpack.c.bf16 %v325, %v324
    %v351 = vpack.c.bf16 %v327, %v326
    %v352 = vpack.c.bf16 %v329, %v328
    %v353 = vpack.c.bf16 %v331, %v330
    %v354 = vpack.c.bf16 %v333, %v332
    %v355 = vpack.c.bf16 %v335, %v334
    %v356 = vpack.c.bf16 %v337, %v336
    %v357 = vpack.c.bf16 %v339, %v338
    %v358 = vpack.c.bf16 %v341, %v340
    %v359 = vpack.c.bf16 %v343, %v342
    %v360 = vpack.c.bf16 %v345, %v344
    %v361 = vpack.c.bf16 %v347, %v346
    %v362 = vpack.c.bf16 %v349, %v348
    %v364 = vlaneseq
    %v365 = vshrl.u32 %v364, 7
    %v366 = vsub.s32 0, %v365
    %v367 = vrot.slane %v37, %v366
    %v377 = vunpack.c.l.b16 %v29
    %v378 = vunpack.c.l.b16 %v30
    %v379 = vunpack.c.l.b16 %v31
    %v380 = vunpack.c.l.b16 %v32
    %v381 = vunpack.c.l.b16 %v33
    %v382 = vunpack.c.l.b16 %v34
    %v383 = vunpack.c.l.b16 %v35
    %v384 = vunpack.c.l.b16 %v36
    %v385 = vpack.c.b16 %v378, %v377
    %v386 = vpack.c.b16 %v380, %v379
    %v387 = vpack.c.b16 %v382, %v381
    %v388 = vpack.c.b16 %v384, %v383
    %vm393 = vcmask 523264
    %v395 = vsel %vm393, %v350, 0
    %v398 = vsel %vm393, %v351, 0
    %v401 = vsel %vm393, %v352, 0
    %v404 = vsel %vm393, %v353, 0
    %v407 = vsel %vm393, %v354, 0
    %v410 = vsel %vm393, %v355, 0
    %v413 = vsel %vm393, %v356, 0
    %v416 = vsel %vm393, %v357, 0
    %v419 = vsel %vm393, %v358, 0
    %v422 = vsel %vm393, %v359, 0
    %v425 = vsel %vm393, %v360, 0
    %v428 = vsel %vm393, %v361, 0
    %v431 = vsel %vm393, %v362, 0
    %433 = vmatprep.subr.bf16.mxu0 0
    %434 = vmatpush1.bf16.msra.mxu0 %v385
    %435 = vmatprep.subr.bf16.mxu0 0
    %436 = vmatpush1.bf16.msra.mxu0 %v386
    %437 = vmatprep.subr.bf16.mxu0 0
    %438 = vmatpush1.bf16.msra.mxu0 %v387
    %439 = vmatprep.subr.bf16.mxu0 0
    %440 = vmatpush1.bf16.msra.mxu0 %v388
    %441 = vmatprep.subr.bf16.mxu0 0
    %442 = vmatpush1.bf16.msra.mxu0 0
    %443 = vmatprep.subr.bf16.mxu0 0
    %444 = vmatpush1.bf16.msra.mxu0 0
    %445 = vmatprep.subr.bf16.mxu0 0
    %446 = vmatpush1.bf16.msra.mxu0 0
    %447 = vmatprep.subr.bf16.mxu0 0
    %448 = vmatpush1.bf16.msra.mxu0 0
    %449 = vmatprep.subr.bf16.mxu0 0
    %450 = vmatpush1.bf16.msra.mxu0 0
    %451 = vmatprep.subr.bf16.mxu0 0
    %452 = vmatpush1.bf16.msra.mxu0 0
    %453 = vmatprep.subr.bf16.mxu0 0
    %454 = vmatpush1.bf16.msra.mxu0 0
    %455 = vmatprep.subr.bf16.mxu0 0
    %456 = vmatpush1.bf16.msra.mxu0 0
    %457 = vmatprep.subr.bf16.mxu0 0
    %458 = vmatpush1.bf16.msra.mxu0 0
    %459 = vmatprep.subr.bf16.mxu0 0
    %460 = vmatpush1.bf16.msra.mxu0 0
    %461 = vmatprep.subr.bf16.mxu0 0
    %462 = vmatpush1.bf16.msra.mxu0 0
    %463 = vmatprep.subr.bf16.mxu0 0
    %464 = vmatpush1.bf16.msra.mxu0 0
    %465 = vmatprep.mubr.bf16.mxu0 0
    %466 = vmatmul.mubr.bf16.gmra.mrb[0].mxu0 %v395
    %v467 = vpop.f32.mrb[0].mxu0
    %v468 = vadd.f32 %v367, %v467
    %v469 = vpop.f32.mrb[0].mxu0
    %v470 = vpop.f32.mrb[0].mxu0
    %v471 = vadd.f32 %v367, %v470
    %v472 = vpop.f32.mrb[0].mxu0
    %473 = vmatprep.mubr.bf16.mxu0 0
    %474 = vmatmul.mubr.bf16.gmra.mrb[0].mxu0 %v398
    %v475 = vpop.f32.mrb[0].mxu0
    %v476 = vadd.f32 %v367, %v475
    %v477 = vpop.f32.mrb[0].mxu0
    %v478 = vpop.f32.mrb[0].mxu0
    %v479 = vadd.f32 %v367, %v478
    %v480 = vpop.f32.mrb[0].mxu0
    %481 = vmatprep.mubr.bf16.mxu0 0
    %482 = vmatmul.mubr.bf16.gmra.mrb[0].mxu0 %v401
    %v483 = vpop.f32.mrb[0].mxu0
    %v484 = vadd.f32 %v367, %v483
    %v485 = vpop.f32.mrb[0].mxu0
    %v486 = vpop.f32.mrb[0].mxu0
    %v487 = vadd.f32 %v367, %v486
    %v488 = vpop.f32.mrb[0].mxu0
    %489 = vmatprep.mubr.bf16.mxu0 0
    %490 = vmatmul.mubr.bf16.gmra.mrb[0].mxu0 %v404
    %v491 = vpop.f32.mrb[0].mxu0
    %v492 = vadd.f32 %v367, %v491
    %v493 = vpop.f32.mrb[0].mxu0
    %v494 = vpop.f32.mrb[0].mxu0
    %v495 = vadd.f32 %v367, %v494
    %v496 = vpop.f32.mrb[0].mxu0
    %497 = vmatprep.mubr.bf16.mxu0 0
    %498 = vmatmul.mubr.bf16.gmra.mrb[0].mxu0 %v407
    %v499 = vpop.f32.mrb[0].mxu0
    %v500 = vadd.f32 %v367, %v499
    %v501 = vpop.f32.mrb[0].mxu0
    %v502 = vpop.f32.mrb[0].mxu0
    %v503 = vadd.f32 %v367, %v502
    %v504 = vpop.f32.mrb[0].mxu0
    %505 = vmatprep.mubr.bf16.mxu0 0
    %506 = vmatmul.mubr.bf16.gmra.mrb[0].mxu0 %v410
    %v507 = vpop.f32.mrb[0].mxu0
    %v508 = vadd.f32 %v367, %v507
    %v509 = vpop.f32.mrb[0].mxu0
    %v510 = vpop.f32.mrb[0].mxu0
    %v511 = vadd.f32 %v367, %v510
    %v512 = vpop.f32.mrb[0].mxu0
    %513 = vmatprep.mubr.bf16.mxu0 0
    %514 = vmatmul.mubr.bf16.gmra.mrb[0].mxu0 %v413
    %v515 = vpop.f32.mrb[0].mxu0
    %v516 = vadd.f32 %v367, %v515
    %v517 = vpop.f32.mrb[0].mxu0
    %v518 = vpop.f32.mrb[0].mxu0
    %v519 = vadd.f32 %v367, %v518
    %v520 = vpop.f32.mrb[0].mxu0
    %521 = vmatprep.mubr.bf16.mxu0 0
    %522 = vmatmul.mubr.bf16.gmra.mrb[0].mxu0 %v416
    %v523 = vpop.f32.mrb[0].mxu0
    %v524 = vadd.f32 %v367, %v523
    %v525 = vpop.f32.mrb[0].mxu0
    %v526 = vpop.f32.mrb[0].mxu0
    %v527 = vadd.f32 %v367, %v526
    %v528 = vpop.f32.mrb[0].mxu0
    %529 = vmatprep.mubr.bf16.mxu0 0
    %530 = vmatmul.mubr.bf16.gmra.mrb[0].mxu0 %v419
    %v531 = vpop.f32.mrb[0].mxu0
    %v532 = vadd.f32 %v367, %v531
    %v533 = vpop.f32.mrb[0].mxu0
    %v534 = vpop.f32.mrb[0].mxu0
    %v535 = vadd.f32 %v367, %v534
    %v536 = vpop.f32.mrb[0].mxu0
    %537 = vmatprep.mubr.bf16.mxu0 0
    %538 = vmatmul.mubr.bf16.gmra.mrb[0].mxu0 %v422
    %v539 = vpop.f32.mrb[0].mxu0
    %v540 = vadd.f32 %v367, %v539
    %v541 = vpop.f32.mrb[0].mxu0
    %v542 = vpop.f32.mrb[0].mxu0
    %v543 = vadd.f32 %v367, %v542
    %v544 = vpop.f32.mrb[0].mxu0
    %545 = vmatprep.mubr.bf16.mxu0 0
    %546 = vmatmul.mubr.bf16.gmra.mrb[0].mxu0 %v425
    %v547 = vpop.f32.mrb[0].mxu0
    %v548 = vadd.f32 %v367, %v547
    %v549 = vpop.f32.mrb[0].mxu0
    %v550 = vpop.f32.mrb[0].mxu0
    %v551 = vadd.f32 %v367, %v550
    %v552 = vpop.f32.mrb[0].mxu0
    %553 = vmatprep.mubr.bf16.mxu0 0
    %554 = vmatmul.mubr.bf16.gmra.mrb[0].mxu0 %v428
    %v555 = vpop.f32.mrb[0].mxu0
    %v556 = vadd.f32 %v367, %v555
    %v557 = vpop.f32.mrb[0].mxu0
    %v558 = vpop.f32.mrb[0].mxu0
    %v559 = vadd.f32 %v367, %v558
    %v560 = vpop.f32.mrb[0].mxu0
    %561 = vmatprep.mubr.bf16.mxu0 0
    %562 = vmatmul.mubr.bf16.gmra.mrb[0].mxu0 %v431
    %v563 = vpop.f32.mrb[0].mxu0
    %v564 = vadd.f32 %v367, %v563
    %v565 = vpop.f32.mrb[0].mxu0
    %v566 = vpop.f32.mrb[0].mxu0
    %v567 = vadd.f32 %v367, %v566
    %v568 = vpop.f32.mrb[0].mxu0
    %569 = vdwg.mxu0
    %v570 = vxor.u32 %v468, 2147483648
    %v571 = vxor.u32 %v471, 2147483648
    %v572 = vxor.u32 %v476, 2147483648
    %v573 = vxor.u32 %v479, 2147483648
    %v574 = vxor.u32 %v484, 2147483648
    %v575 = vxor.u32 %v487, 2147483648
    %v576 = vxor.u32 %v492, 2147483648
    %v577 = vxor.u32 %v495, 2147483648
    %v578 = vxor.u32 %v500, 2147483648
    %v579 = vxor.u32 %v503, 2147483648
    %v580 = vxor.u32 %v508, 2147483648
    %v581 = vxor.u32 %v511, 2147483648
    %v582 = vxor.u32 %v516, 2147483648
    %v583 = vxor.u32 %v519, 2147483648
    %v584 = vxor.u32 %v524, 2147483648
    %v585 = vxor.u32 %v527, 2147483648
    %v586 = vxor.u32 %v532, 2147483648
    %v587 = vxor.u32 %v535, 2147483648
    %v588 = vxor.u32 %v540, 2147483648
    %v589 = vxor.u32 %v543, 2147483648
    %v590 = vxor.u32 %v548, 2147483648
    %v591 = vxor.u32 %v551, 2147483648
    %v592 = vxor.u32 %v556, 2147483648
    %v593 = vxor.u32 %v559, 2147483648
    %v594 = vxor.u32 %v564, 2147483648
    %v595 = vxor.u32 %v567, 2147483648
    %v596 = vmul.f32 %v570, 1.442695
    %v597 = vpow.pop %v596
    %v598 = vmul.f32 %v571, 1.442695
    %v599 = vpow.pop %v598
    %v600 = vmul.f32 %v572, 1.442695
    %v601 = vpow.pop %v600
    %v602 = vmul.f32 %v573, 1.442695
    %v603 = vpow.pop %v602
    %v604 = vmul.f32 %v574, 1.442695
    %v605 = vpow.pop %v604
    %v606 = vmul.f32 %v575, 1.442695
    %v607 = vpow.pop %v606
    %v608 = vmul.f32 %v576, 1.442695
    %v609 = vpow.pop %v608
    %v610 = vmul.f32 %v577, 1.442695
    %v611 = vpow.pop %v610
    %v612 = vmul.f32 %v578, 1.442695
    %v613 = vpow.pop %v612
    %v614 = vmul.f32 %v579, 1.442695
    %v615 = vpow.pop %v614
    %v616 = vmul.f32 %v580, 1.442695
    %v617 = vpow.pop %v616
    %v618 = vmul.f32 %v581, 1.442695
    %v619 = vpow.pop %v618
    %v620 = vmul.f32 %v582, 1.442695
    %v621 = vpow.pop %v620
    %v622 = vmul.f32 %v583, 1.442695
    %v623 = vpow.pop %v622
    %v624 = vmul.f32 %v584, 1.442695
    %v625 = vpow.pop %v624
    %v626 = vmul.f32 %v585, 1.442695
    %v627 = vpow.pop %v626
    %v628 = vmul.f32 %v586, 1.442695
    %v629 = vpow.pop %v628
    %v630 = vmul.f32 %v587, 1.442695
    %v631 = vpow.pop %v630
    %v632 = vmul.f32 %v588, 1.442695
    %v633 = vpow.pop %v632
    %v634 = vmul.f32 %v589, 1.442695
    %v635 = vpow.pop %v634
    %v636 = vmul.f32 %v590, 1.442695
    %v637 = vpow.pop %v636
    %v638 = vmul.f32 %v591, 1.442695
    %v639 = vpow.pop %v638
    %v640 = vmul.f32 %v592, 1.442695
    %v641 = vpow.pop %v640
    %v642 = vmul.f32 %v593, 1.442695
    %v643 = vpow.pop %v642
    %v644 = vmul.f32 %v594, 1.442695
    %v645 = vpow.pop %v644
    %v646 = vmul.f32 %v595, 1.442695
    %v647 = vpow.pop %v646
    %v648 = vadd.f32 %v597, 1.0
    %v649 = vadd.f32 %v599, 1.0
    %v650 = vadd.f32 %v601, 1.0
    %v651 = vadd.f32 %v603, 1.0
    %v652 = vadd.f32 %v605, 1.0
    %v653 = vadd.f32 %v607, 1.0
    %v654 = vadd.f32 %v609, 1.0
    %v655 = vadd.f32 %v611, 1.0
    %v656 = vadd.f32 %v613, 1.0
    %v657 = vadd.f32 %v615, 1.0
    %v658 = vadd.f32 %v617, 1.0
    %v659 = vadd.f32 %v619, 1.0
    %v660 = vadd.f32 %v621, 1.0
    %v661 = vadd.f32 %v623, 1.0
    %v662 = vadd.f32 %v625, 1.0
    %v663 = vadd.f32 %v627, 1.0
    %v664 = vadd.f32 %v629, 1.0
    %v665 = vadd.f32 %v631, 1.0
    %v666 = vadd.f32 %v633, 1.0
    %v667 = vadd.f32 %v635, 1.0
    %v668 = vadd.f32 %v637, 1.0
    %v669 = vadd.f32 %v639, 1.0
    %v670 = vadd.f32 %v641, 1.0
    %v671 = vadd.f32 %v643, 1.0
    %v672 = vadd.f32 %v645, 1.0
    %v673 = vadd.f32 %v647, 1.0
    %v674 = vrcp.pop %v648
    %v675 = vmul.f32 1.0, %v674
    %v676 = vrcp.pop %v649
    %v677 = vmul.f32 1.0, %v676
    %v678 = vrcp.pop %v650
    %v679 = vmul.f32 1.0, %v678
    %v680 = vrcp.pop %v651
    %v681 = vmul.f32 1.0, %v680
    %v682 = vrcp.pop %v652
    %v683 = vmul.f32 1.0, %v682
    %v684 = vrcp.pop %v653
    %v685 = vmul.f32 1.0, %v684
    %v686 = vrcp.pop %v654
    %v687 = vmul.f32 1.0, %v686
    %v688 = vrcp.pop %v655
    %v689 = vmul.f32 1.0, %v688
    %v690 = vrcp.pop %v656
    %v691 = vmul.f32 1.0, %v690
    %v692 = vrcp.pop %v657
    %v693 = vmul.f32 1.0, %v692
    %v694 = vrcp.pop %v658
    %v695 = vmul.f32 1.0, %v694
    %v696 = vrcp.pop %v659
    %v697 = vmul.f32 1.0, %v696
    %v698 = vrcp.pop %v660
    %v699 = vmul.f32 1.0, %v698
    %v700 = vrcp.pop %v661
    %v701 = vmul.f32 1.0, %v700
    %v702 = vrcp.pop %v662
    %v703 = vmul.f32 1.0, %v702
    %v704 = vrcp.pop %v663
    %v705 = vmul.f32 1.0, %v704
    %v706 = vrcp.pop %v664
    %v707 = vmul.f32 1.0, %v706
    %v708 = vrcp.pop %v665
    %v709 = vmul.f32 1.0, %v708
    %v710 = vrcp.pop %v666
    %v711 = vmul.f32 1.0, %v710
    %v712 = vrcp.pop %v667
    %v713 = vmul.f32 1.0, %v712
    %v714 = vrcp.pop %v668
    %v715 = vmul.f32 1.0, %v714
    %v716 = vrcp.pop %v669
    %v717 = vmul.f32 1.0, %v716
    %v718 = vrcp.pop %v670
    %v719 = vmul.f32 1.0, %v718
    %v720 = vrcp.pop %v671
    %v721 = vmul.f32 1.0, %v720
    %v722 = vrcp.pop %v672
    %v723 = vmul.f32 1.0, %v722
    %v724 = vrcp.pop %v673
    %v725 = vmul.f32 1.0, %v724
    %vm726 = vcmask 64512
    %727 = vst.msk [vmem:[#allocation2] sm:$0xff] %vm726, %v675
    %728 = vst.msk [vmem:[#allocation2 + $0x8] sm:$0xff] %vm726, %v677
    %729 = vst.msk [vmem:[#allocation2 + $0x10] sm:$0xff] %vm726, %v679
    %730 = vst.msk [vmem:[#allocation2 + $0x18] sm:$0xff] %vm726, %v681
    %731 = vst.msk [vmem:[#allocation2 + $0x20] sm:$0xff] %vm726, %v683
    %732 = vst.msk [vmem:[#allocation2 + $0x28] sm:$0xff] %vm726, %v685
    %733 = vst.msk [vmem:[#allocation2 + $0x30] sm:$0xff] %vm726, %v687
    %734 = vst.msk [vmem:[#allocation2 + $0x38] sm:$0xff] %vm726, %v689
    %735 = vst.msk [vmem:[#allocation2 + $0x40] sm:$0xff] %vm726, %v691
    %736 = vst.msk [vmem:[#allocation2 + $0x48] sm:$0xff] %vm726, %v693
    %737 = vst.msk [vmem:[#allocation2 + $0x50] sm:$0xff] %vm726, %v695
    %738 = vst.msk [vmem:[#allocation2 + $0x58] sm:$0xff] %vm726, %v697
    %739 = vst.msk [vmem:[#allocation2 + $0x60] sm:$0xff] %vm726, %v699
    %740 = vst.msk [vmem:[#allocation2 + $0x68] sm:$0xff] %vm726, %v701
    %741 = vst.msk [vmem:[#allocation2 + $0x70] sm:$0xff] %vm726, %v703
    %742 = vst.msk [vmem:[#allocation2 + $0x78] sm:$0xff] %vm726, %v705
    %743 = vst.msk [vmem:[#allocation2 + $0x80] sm:$0xff] %vm726, %v707
    %744 = vst.msk [vmem:[#allocation2 + $0x88] sm:$0xff] %vm726, %v709
    %745 = vst.msk [vmem:[#allocation2 + $0x90] sm:$0xff] %vm726, %v711
    %746 = vst.msk [vmem:[#allocation2 + $0x98] sm:$0xff] %vm726, %v713
    %747 = vst.msk [vmem:[#allocation2 + $0xa0] sm:$0xff] %vm726, %v715
    %748 = vst.msk [vmem:[#allocation2 + $0xa8] sm:$0xff] %vm726, %v717
    %749 = vst.msk [vmem:[#allocation2 + $0xb0] sm:$0xff] %vm726, %v719
    %750 = vst.msk [vmem:[#allocation2 + $0xb8] sm:$0xff] %vm726, %v721
    %751 = vst.msk [vmem:[#allocation2 + $0xc0] sm:$0xff] %vm726, %v723
    %752 = vst.msk [vmem:[#allocation2 + $0xc8] sm:$0xff] %vm726, %v725
    // Predicated region
    $region26: #{tpu_custom_call.1} parent=1 // pred_check
      _
    $region27: #{tpu_custom_call.1} parent=1 // pred_check_branch
      %754 = sbr.rel (0) target = $region29
    $region28: #{tpu_custom_call.1} parent=1 // pred_region
      // Predicated region
      $region30: #{tpu_custom_call.1} parent=28 // pred_check
        _
      $region31: #{tpu_custom_call.1} parent=28 // pred_check_branch
        %756 = sbr.rel (0) target = $region33
      $region32: #{tpu_custom_call.1} parent=28 // pred_region
        // Predicated region
        $region34: #{tpu_custom_call.1} parent=32 // pred_check
          _
        $region35: #{tpu_custom_call.1} parent=32 // pred_check_branch
          %758 = sbr.rel (0) target = $region37
        $region36: #{tpu_custom_call.1} parent=32 // pred_region
          // Predicated region
          $region49: #{tpu_custom_call.1} parent=36 // pred_check
            _
          $region50: #{tpu_custom_call.1} parent=36 // pred_check_branch
            %821 = sbr.rel (0) target = $region52
          $region51: #{tpu_custom_call.1} parent=36 // pred_region
            loop: start=0, step=1, limit=1
            $region53: #{tpu_custom_call.1} parent=51 // loop_pre_header
              _
            $region54: #{tpu_custom_call.1} parent=51 // loop_header
              %s823 = sphi 0, %s827
              %p824 = scmp.ge.s32.totalorder %s823, 1
              %s828 = sphi [#allocation2], [#allocation2]
              %s829 = sphi %s6, %s6
            $region55: #{tpu_custom_call.1} parent=51 // loop_header_branch
              %826 = sbr.rel (%p824) target = $region59
            $region56: #{tpu_custom_call.1} parent=51 // loop_body
              %v830 = vld [vmem:[%s828] sm:$0xff]
              %831 = vst [vmem:[%s829] sm:$0xff] %v830
              %v832 = vld [vmem:[%s828 + $0x8] sm:$0xff]
              %833 = vst [vmem:[%s829 + $0x8] sm:$0xff] %v832
              %v834 = vld [vmem:[%s828 + $0x10] sm:$0xff]
              %835 = vst [vmem:[%s829 + $0x10] sm:$0xff] %v834
              %v836 = vld [vmem:[%s828 + $0x18] sm:$0xff]
              %837 = vst [vmem:[%s829 + $0x18] sm:$0xff] %v836
              %v838 = vld [vmem:[%s828 + $0x20] sm:$0xff]
              %839 = vst [vmem:[%s829 + $0x20] sm:$0xff] %v838
              %v840 = vld [vmem:[%s828 + $0x28] sm:$0xff]
              %841 = vst [vmem:[%s829 + $0x28] sm:$0xff] %v840
              %v842 = vld [vmem:[%s828 + $0x30] sm:$0xff]
              %843 = vst [vmem:[%s829 + $0x30] sm:$0xff] %v842
              %v844 = vld [vmem:[%s828 + $0x38] sm:$0xff]
              %845 = vst [vmem:[%s829 + $0x38] sm:$0xff] %v844
              %v846 = vld [vmem:[%s828 + $0x40] sm:$0xff]
              %847 = vst [vmem:[%s829 + $0x40] sm:$0xff] %v846
              %v848 = vld [vmem:[%s828 + $0x48] sm:$0xff]
              %849 = vst [vmem:[%s829 + $0x48] sm:$0xff] %v848
              %v850 = vld [vmem:[%s828 + $0x50] sm:$0xff]
              %851 = vst [vmem:[%s829 + $0x50] sm:$0xff] %v850
              %v852 = vld [vmem:[%s828 + $0x58] sm:$0xff]
              %853 = vst [vmem:[%s829 + $0x58] sm:$0xff] %v852
              %v854 = vld [vmem:[%s828 + $0x60] sm:$0xff]
              %855 = vst [vmem:[%s829 + $0x60] sm:$0xff] %v854
              %v856 = vld [vmem:[%s828 + $0x68] sm:$0xff]
              %857 = vst [vmem:[%s829 + $0x68] sm:$0xff] %v856
              %v858 = vld [vmem:[%s828 + $0x70] sm:$0xff]
              %859 = vst [vmem:[%s829 + $0x70] sm:$0xff] %v858
              %v860 = vld [vmem:[%s828 + $0x78] sm:$0xff]
              %861 = vst [vmem:[%s829 + $0x78] sm:$0xff] %v860
              %v862 = vld [vmem:[%s828 + $0x80] sm:$0xff]
              %863 = vst [vmem:[%s829 + $0x80] sm:$0xff] %v862
              %v864 = vld [vmem:[%s828 + $0x88] sm:$0xff]
              %865 = vst [vmem:[%s829 + $0x88] sm:$0xff] %v864
              %v866 = vld [vmem:[%s828 + $0x90] sm:$0xff]
              %867 = vst [vmem:[%s829 + $0x90] sm:$0xff] %v866
              %v868 = vld [vmem:[%s828 + $0x98] sm:$0xff]
              %869 = vst [vmem:[%s829 + $0x98] sm:$0xff] %v868
              %v870 = vld [vmem:[%s828 + $0xa0] sm:$0xff]
              %871 = vst [vmem:[%s829 + $0xa0] sm:$0xff] %v870
              %v872 = vld [vmem:[%s828 + $0xa8] sm:$0xff]
              %873 = vst [vmem:[%s829 + $0xa8] sm:$0xff] %v872
              %v874 = vld [vmem:[%s828 + $0xb0] sm:$0xff]
              %875 = vst [vmem:[%s829 + $0xb0] sm:$0xff] %v874
              %v876 = vld [vmem:[%s828 + $0xb8] sm:$0xff]
              %877 = vst [vmem:[%s829 + $0xb8] sm:$0xff] %v876
              %v878 = vld [vmem:[%s828 + $0xc0] sm:$0xff]
              %879 = vst [vmem:[%s829 + $0xc0] sm:$0xff] %v878
            $region57: #{tpu_custom_call.1} parent=51 // loop_footer
              %s827 = sadd.s32 1, %s823
            $region58: #{tpu_custom_call.1} parent=51 // loop_footer_branch
              %822 = sbr.rel target = $region54
            $region59: #{tpu_custom_call.1} parent=51 // loop_exit
              _
          $region52: #{tpu_custom_call.1} parent=36 // pred_fallthru
            _
          // Predicated region
          $region60: #{tpu_custom_call.1} parent=36 // pred_check
            _
          $region61: #{tpu_custom_call.1} parent=36 // pred_check_branch
            %881 = sbr.rel target = $region63
          $region62: #{tpu_custom_call.1} parent=36 // pred_region
            _
          $region63: #{tpu_custom_call.1} parent=36 // pred_fallthru
            _
        $region37: #{tpu_custom_call.1} parent=32 // pred_fallthru
          _
        // Predicated region
        $region38: #{tpu_custom_call.1} parent=32 // pred_check
          _
        $region39: #{tpu_custom_call.1} parent=32 // pred_check_branch
          %760 = sbr.rel target = $region41
        $region40: #{tpu_custom_call.1} parent=32 // pred_region
          loop: start=0, step=1, limit=1
          $region42: #{tpu_custom_call.1} parent=40 // loop_pre_header
            _
          $region43: #{tpu_custom_call.1} parent=40 // loop_header
            %s763 = sphi 0, %s767
            %p764 = scmp.ge.s32.totalorder %s763, 1
            %s768 = sphi [#allocation2], [#allocation2]
            %s769 = sphi %s6, %s6
          $region44: #{tpu_custom_call.1} parent=40 // loop_header_branch
            %766 = sbr.rel (%p764) target = $region48
          $region45: #{tpu_custom_call.1} parent=40 // loop_body
            %v770 = vld [vmem:[%s768] sm:$0xff]
            %771 = vst [vmem:[%s769] sm:$0xff] %v770
            %v772 = vld [vmem:[%s768 + $0x8] sm:$0xff]
            %773 = vst [vmem:[%s769 + $0x8] sm:$0xff] %v772
            %v774 = vld [vmem:[%s768 + $0x10] sm:$0xff]
            %775 = vst [vmem:[%s769 + $0x10] sm:$0xff] %v774
            %v776 = vld [vmem:[%s768 + $0x18] sm:$0xff]
            %777 = vst [vmem:[%s769 + $0x18] sm:$0xff] %v776
            %v778 = vld [vmem:[%s768 + $0x20] sm:$0xff]
            %779 = vst [vmem:[%s769 + $0x20] sm:$0xff] %v778
            %v780 = vld [vmem:[%s768 + $0x28] sm:$0xff]
            %781 = vst [vmem:[%s769 + $0x28] sm:$0xff] %v780
            %v782 = vld [vmem:[%s768 + $0x30] sm:$0xff]
            %783 = vst [vmem:[%s769 + $0x30] sm:$0xff] %v782
            %v784 = vld [vmem:[%s768 + $0x38] sm:$0xff]
            %785 = vst [vmem:[%s769 + $0x38] sm:$0xff] %v784
            %v786 = vld [vmem:[%s768 + $0x40] sm:$0xff]
            %787 = vst [vmem:[%s769 + $0x40] sm:$0xff] %v786
            %v788 = vld [vmem:[%s768 + $0x48] sm:$0xff]
            %789 = vst [vmem:[%s769 + $0x48] sm:$0xff] %v788
            %v790 = vld [vmem:[%s768 + $0x50] sm:$0xff]
            %791 = vst [vmem:[%s769 + $0x50] sm:$0xff] %v790
            %v792 = vld [vmem:[%s768 + $0x58] sm:$0xff]
            %793 = vst [vmem:[%s769 + $0x58] sm:$0xff] %v792
            %v794 = vld [vmem:[%s768 + $0x60] sm:$0xff]
            %795 = vst [vmem:[%s769 + $0x60] sm:$0xff] %v794
            %v796 = vld [vmem:[%s768 + $0x68] sm:$0xff]
            %797 = vst [vmem:[%s769 + $0x68] sm:$0xff] %v796
            %v798 = vld [vmem:[%s768 + $0x70] sm:$0xff]
            %799 = vst [vmem:[%s769 + $0x70] sm:$0xff] %v798
            %v800 = vld [vmem:[%s768 + $0x78] sm:$0xff]
            %801 = vst [vmem:[%s769 + $0x78] sm:$0xff] %v800
            %v802 = vld [vmem:[%s768 + $0x80] sm:$0xff]
            %803 = vst [vmem:[%s769 + $0x80] sm:$0xff] %v802
            %v804 = vld [vmem:[%s768 + $0x88] sm:$0xff]
            %805 = vst [vmem:[%s769 + $0x88] sm:$0xff] %v804
            %v806 = vld [vmem:[%s768 + $0x90] sm:$0xff]
            %807 = vst [vmem:[%s769 + $0x90] sm:$0xff] %v806
            %v808 = vld [vmem:[%s768 + $0x98] sm:$0xff]
            %809 = vst [vmem:[%s769 + $0x98] sm:$0xff] %v808
            %v810 = vld [vmem:[%s768 + $0xa0] sm:$0xff]
            %811 = vst [vmem:[%s769 + $0xa0] sm:$0xff] %v810
            %v812 = vld [vmem:[%s768 + $0xa8] sm:$0xff]
            %813 = vst [vmem:[%s769 + $0xa8] sm:$0xff] %v812
            %v814 = vld [vmem:[%s768 + $0xb0] sm:$0xff]
            %815 = vst [vmem:[%s769 + $0xb0] sm:$0xff] %v814
            %v816 = vld [vmem:[%s768 + $0xb8] sm:$0xff]
            %817 = vst [vmem:[%s769 + $0xb8] sm:$0xff] %v816
            %v818 = vld [vmem:[%s768 + $0xc0] sm:$0xff]
            %819 = vst [vmem:[%s769 + $0xc0] sm:$0xff] %v818
          $region46: #{tpu_custom_call.1} parent=40 // loop_footer
            %s767 = sadd.s32 1, %s763
          $region47: #{tpu_custom_call.1} parent=40 // loop_footer_branch
            %762 = sbr.rel target = $region43
          $region48: #{tpu_custom_call.1} parent=40 // loop_exit
            _
        $region41: #{tpu_custom_call.1} parent=32 // pred_fallthru
          _
      $region33: #{tpu_custom_call.1} parent=28 // pred_fallthru
        _
      %882 = vnop
    $region29: #{tpu_custom_call.1} parent=1 // pred_fallthru
      _
    // Predicated region
    $region64: #{tpu_custom_call.1} parent=1 // pred_check
      _
    $region65: #{tpu_custom_call.1} parent=1 // pred_check_branch
      %884 = sbr.rel (0) target = $region67
    $region66: #{tpu_custom_call.1} parent=1 // pred_region
      _
    $region67: #{tpu_custom_call.1} parent=1 // pred_fallthru
      _

</llo_original>
